<compile_context>
chip_gen: v7x
topology: tpu7x:2x2x1
jax: 0.10.0
libtpu: 0.0.40
codegen_flags: <defaults>
</compile_context>

<pallas_src>
import math

import numpy as np
import jax
import jax.numpy as jnp
from jax import lax
from jax.experimental import pallas as pl
from jax.experimental.pallas import tpu as pltpu

EPS = 1e-5
N_CONV = 6          # six 1x1 convs
N_PAIR = 3          # fused as three conv-pairs, each followed by BatchNorm
MARGIN = 6          # each conv grows the valid region by 1 px per side


def _make_kernel(Ch, Cw, HWp):
    """Kernel over a channel-major flattened canvas [8, HWp] (lane padded)."""

    def kernel(x_ref, p_ref, edge_ref, o_ref):
        x = x_ref[...]                                    # [8, HWp] f32 activations
        # Per-lane distance to the nearest canvas edge (< 0 on the lane-pad
        # tail).  Broadcast once to all 8 sublanes; every mask is then a single
        # VPU compare against a trace-time constant.
        db = jnp.broadcast_to(edge_ref[0:1, :], (8, HWp))

        for k in range(N_PAIR):
            off_mid = MARGIN - (2 * k + 1)                # valid offset after conv 2k
            off_out = MARGIN - (2 * k + 2)                # valid offset after conv 2k+1

            p = p_ref[k]                                  # [8, 16] packed params
            wf = p[:, 0:8]                                # fused W2 @ W1
            c1 = p[:, 8:9]                                # W2 @ b1
            b2 = p[:, 9:10]                               # b2
            g = p[:, 10:11]                               # BN gamma
            bt = p[:, 11:12]                              # BN beta

            in_mid = db >= float(off_mid)                 # [8, HWp] valid after conv 2k
            in_out = db >= float(off_out)                 # [8, HWp] valid after conv 2k+1

            # Fused conv pair: one MXU matmul + padding-correct border rings
            #   inner region : Wf@x + W2@b1 + b2
            #   mid ring     : W2@b1 + b2     (x == 0 there)
            #   outer ring   : b2             (in_mid False there)
            #   outside      : 0              (in_out False, incl. lane-pad tail)
            y = jnp.dot(wf, x, preferred_element_type=jnp.float32)
            y = y + jnp.where(in_mid, c1 + b2, b2)
            y = jnp.where(in_out, y, 0.0)

            # BatchNorm2d, training mode (batch stats, biased variance) over the
            # valid region; masked-out lanes are exactly zero so plain lane sums
            # work.  Two-pass variance for numerical robustness.
            inv_n = 1.0 / float((Ch - 2 * off_out) * (Cw - 2 * off_out))
            mean = jnp.sum(y, axis=1, keepdims=True) * inv_n          # [8, 1]
            cen = jnp.where(in_out, y - mean, 0.0)
            var = jnp.sum(cen * cen, axis=1, keepdims=True) * inv_n   # [8, 1]
            y = g * (cen * lax.rsqrt(var + EPS)) + bt

            if k < N_PAIR - 1:
                y = jnp.where(in_out, y, 0.0)             # out-of-extent lanes stay 0
            # (last pair: whole canvas is valid; tail garbage is sliced off outside)
            x = y

        o_ref[...] = x

    return kernel


def _build_edge(Ch, Cw, HWp):
    """Trace-time constant: per-lane min distance to the canvas border.

    mask(offset) == (edge >= offset).  Lane-pad tail gets a negative value so
    it is excluded from every mask (and hence from every BN statistic).
    """
    idx = np.arange(HWp)
    r, c = idx // Cw, idx % Cw
    d = np.minimum(np.minimum(r, Ch - 1 - r), np.minimum(c, Cw - 1 - c))
    return d.reshape(1, HWp).astype(np.float32)


def prepare_params(weights, biases, gammas, betas):
    """One-time init-side prep: pad conv0 in-channels 3->8, fuse conv pairs,
    and pack all per-pair parameters into a single [3, 8, 16] slab:
      cols 0:8 = Wf (= W2 @ W1), col 8 = W2@b1, col 9 = b2,
      col 10 = gamma, col 11 = beta, cols 12:16 = 0.
    """
    w0 = jnp.zeros((8, 8), jnp.float32).at[:, : weights[0].shape[1]].set(weights[0])
    ws = [w0] + [jnp.asarray(w, jnp.float32) for w in weights[1:]]
    bs = [jnp.asarray(b, jnp.float32) for b in biases]
    blocks = []
    for k in range(N_PAIR):
        w_a, w_b = ws[2 * k], ws[2 * k + 1]
        b_a, b_b = bs[2 * k], bs[2 * k + 1]
        blk = jnp.zeros((8, 16), jnp.float32)
        blk = blk.at[:, 0:8].set(w_b @ w_a)
        blk = blk.at[:, 8].set(w_b @ b_a)
        blk = blk.at[:, 9].set(b_b)
        blk = blk.at[:, 10].set(jnp.asarray(gammas[k], jnp.float32))
        blk = blk.at[:, 11].set(jnp.asarray(betas[k], jnp.float32))
        blocks.append(blk)
    return jnp.stack(blocks)                              # [3, 8, 16]


@jax.jit
def model_forward_pallas(x, params):
    """x: [1, 3, H, W] float32 (NCHW).  Returns [1, 8, H+12, W+12]."""
    N, c_in, H, W = x.shape
    assert N == 1 and c_in == 3
    # TODO(synk): batch > 1 would need cross-sample BN stats and a leading
    # "parallel" grid axis (to use v7x's second TensorCore); spec runs batch=1.
    Ch, Cw = H + 2 * MARGIN, W + 2 * MARGIN
    HW = Ch * Cw
    HWp = ((HW + 127) // 128) * 128                       # lane-dense slab width

    # Single pad op: channels 3 -> 8 and spatial +MARGIN per side, then flatten
    # channel-major and lane-pad to a multiple of 128.
    canvas = jnp.pad(x[0].astype(jnp.float32),
                     ((0, 8 - c_in), (MARGIN, MARGIN), (MARGIN, MARGIN)))
    flat = canvas.reshape(8, HW)
    if HWp != HW:
        flat = jnp.pad(flat, ((0, 0), (0, HWp - HW)))

    edge = jnp.asarray(_build_edge(Ch, Cw, HWp))          # baked constant [1, HWp]

    vmem = pl.BlockSpec(memory_space=pltpu.MemorySpace.VMEM)
    out = pl.pallas_call(
        _make_kernel(Ch, Cw, HWp),
        out_shape=jax.ShapeDtypeStruct((8, HWp), jnp.float32),
        in_specs=[vmem, vmem, vmem],
        out_specs=vmem,
        input_output_aliases={0: 0},                      # reuse canvas HBM buffer
    )(flat, params, edge)

    return out[:, :HW].reshape(1, 8, Ch, Cw)              # drop lane-pad tail


# ---------------- pure-JAX reference (same math, no Pallas) ----------------
def model_forward_ref(x, weights, biases, gammas, betas):
    y = x
    for s in range(N_CONV):
        w, b = weights[s], biases[s]
        y = jnp.pad(y, ((0, 0), (0, 0), (1, 1), (1, 1)))
        y = jnp.einsum("oc,nchw->nohw", w, y) + b[None, :, None, None]
        if s % 2 == 1:
            k = s // 2
            mean = y.mean(axis=(0, 2, 3), keepdims=True)
            var = y.var(axis=(0, 2, 3), keepdims=True)    # biased, training-mode BN
            y = (gammas[k][None, :, None, None] * (y - mean) / jnp.sqrt(var + EPS)
                 + betas[k][None, :, None, None])
    return y


if __name__ == "__main__":
    key = jax.random.PRNGKey(0)
    H = W = 16                                            # small spatial, 3 input channels
    key, kx = jax.random.split(key)
    x = jax.random.normal(kx, (1, 3, H, W), jnp.float32)

    # deterministic parameter init (Conv2d-style uniform; random BN affine to
    # exercise the gamma/beta path)
    in_channels = [3, 8, 8, 8, 8, 8]
    weights, biases = [], []
    for s in range(N_CONV):
        key, kw, kb = jax.random.split(key, 3)
        cin = in_channels[s]
        bound = 1.0 / math.sqrt(cin)
        weights.append(jax.random.uniform(kw, (8, cin), jnp.float32, -bound, bound))
        biases.append(jax.random.uniform(kb, (8,), jnp.float32, -bound, bound))
    gammas, betas = [], []
    for k in range(N_PAIR):
        key, kg, kbt = jax.random.split(key, 3)
        gammas.append(jax.random.uniform(kg, (8,), jnp.float32, 0.5, 1.5))
        betas.append(jax.random.uniform(kbt, (8,), jnp.float32, -0.5, 0.5))

    params = prepare_params(weights, biases, gammas, betas)   # one-time init prep

    out = model_forward_pallas(x, params)
    out = jax.block_until_ready(out)

    ref = model_forward_ref(x, weights, biases, gammas, betas)
    assert out.shape == (1, 8, H + 12, W + 12), out.shape
    max_err = float(jnp.max(jnp.abs(out - ref)))
    assert jnp.allclose(out, ref, rtol=1e-4, atol=1e-4), max_err

    print("KERNEL_OK")
</pallas_src>

<mosaic_0001>
module attributes {stable_mosaic.version = 11 : i64} {
  func.func @kernel(%arg0: memref<8x896xf32, #tpu.memory_space<vmem>>, %arg1: memref<3x8x16xf32, #tpu.memory_space<vmem>>, %arg2: memref<1x896xf32, #tpu.memory_space<vmem>>, %arg3: memref<8x896xf32, #tpu.memory_space<vmem>>) attributes {dimension_semantics = [], scalar_prefetch = 0 : i64, scratch_operands = 0 : i64, tpu.core_type = #tpu.core_type<tc>} {
    %c0 = arith.constant 0 : index
    %c0_0 = arith.constant 0 : index
    %0 = vector.load %arg0[%c0, %c0_0] : memref<8x896xf32, #tpu.memory_space<vmem>>, vector<8x896xf32>
    %c0_1 = arith.constant 0 : index
    %c0_2 = arith.constant 0 : index
    %1 = vector.load %arg2[%c0_1, %c0_2] : memref<1x896xf32, #tpu.memory_space<vmem>>, vector<1x896xf32>
    %2 = vector.shape_cast %1 : vector<1x896xf32> to vector<1x896xf32>
    %3 = vector.broadcast %2 : vector<1x896xf32> to vector<8x896xf32>
    %c0_3 = arith.constant 0 : index
    %c0_4 = arith.constant 0 : index
    %c0_5 = arith.constant 0 : index
    %4 = vector.load %arg1[%c0_3, %c0_4, %c0_5] : memref<3x8x16xf32, #tpu.memory_space<vmem>>, vector<1x8x16xf32>
    %5 = vector.shape_cast %4 : vector<1x8x16xf32> to vector<8x16xf32>
    %6 = vector.extract_strided_slice %5 {offsets = [0, 0], sizes = [8, 8], strides = [1, 1]} : vector<8x16xf32> to vector<8x8xf32>
    %7 = vector.extract_strided_slice %5 {offsets = [0, 8], sizes = [8, 1], strides = [1, 1]} : vector<8x16xf32> to vector<8x1xf32>
    %8 = vector.extract_strided_slice %5 {offsets = [0, 9], sizes = [8, 1], strides = [1, 1]} : vector<8x16xf32> to vector<8x1xf32>
    %9 = vector.extract_strided_slice %5 {offsets = [0, 10], sizes = [8, 1], strides = [1, 1]} : vector<8x16xf32> to vector<8x1xf32>
    %10 = vector.extract_strided_slice %5 {offsets = [0, 11], sizes = [8, 1], strides = [1, 1]} : vector<8x16xf32> to vector<8x1xf32>
    %cst = arith.constant 5.000000e+00 : f32
    %11 = vector.broadcast %cst : f32 to vector<8x896xf32>
    %12 = arith.cmpf oge, %3, %11 : vector<8x896xf32>
    %cst_6 = arith.constant 4.000000e+00 : f32
    %13 = vector.broadcast %cst_6 : f32 to vector<8x896xf32>
    %14 = arith.cmpf oge, %3, %13 : vector<8x896xf32>
    %cst_7 = arith.constant dense<0.000000e+00> : vector<8x896xf32>
    %15 = tpu.matmul %6, %0, %cst_7 {dimension_numbers = #tpu.dot_dimension_numbers<[1], [0], [0], [1], [0, 0, 1, 1], [], []>} : vector<8x8xf32>, vector<8x896xf32>, vector<8x896xf32> -> vector<8x896xf32>
    %16 = arith.addf %7, %8 : vector<8x1xf32>
    %17 = vector.shape_cast %16 : vector<8x1xf32> to vector<8x1xf32>
    %18 = vector.broadcast %17 : vector<8x1xf32> to vector<8x896xf32>
    %19 = vector.shape_cast %8 : vector<8x1xf32> to vector<8x1xf32>
    %20 = vector.broadcast %19 : vector<8x1xf32> to vector<8x896xf32>
    %21 = arith.select %12, %18, %20 : vector<8x896xi1>, vector<8x896xf32>
    %22 = arith.addf %15, %21 : vector<8x896xf32>
    %cst_8 = arith.constant 0.000000e+00 : f32
    %23 = vector.broadcast %cst_8 : f32 to vector<8x896xf32>
    %24 = arith.select %14, %22, %23 : vector<8x896xi1>, vector<8x896xf32>
    %cst_9 = arith.constant dense<0.000000e+00> : vector<8xf32>
    %25 = vector.multi_reduction <add>, %24, %cst_9 [1] : vector<8x896xf32> to vector<8xf32>
    %26 = vector.shape_cast %25 : vector<8xf32> to vector<8x1xf32>
    %cst_10 = arith.constant 2.500000e-03 : f32
    %27 = vector.broadcast %cst_10 : f32 to vector<8x1xf32>
    %28 = arith.mulf %26, %27 : vector<8x1xf32>
    %29 = vector.broadcast %28 : vector<8x1xf32> to vector<8x896xf32>
    %30 = arith.subf %24, %29 : vector<8x896xf32>
    %cst_11 = arith.constant 0.000000e+00 : f32
    %31 = vector.broadcast %cst_11 : f32 to vector<8x896xf32>
    %32 = arith.select %14, %30, %31 : vector<8x896xi1>, vector<8x896xf32>
    %33 = arith.mulf %32, %32 : vector<8x896xf32>
    %cst_12 = arith.constant dense<0.000000e+00> : vector<8xf32>
    %34 = vector.multi_reduction <add>, %33, %cst_12 [1] : vector<8x896xf32> to vector<8xf32>
    %35 = vector.shape_cast %34 : vector<8xf32> to vector<8x1xf32>
    %cst_13 = arith.constant 2.500000e-03 : f32
    %36 = vector.broadcast %cst_13 : f32 to vector<8x1xf32>
    %37 = arith.mulf %35, %36 : vector<8x1xf32>
    %cst_14 = arith.constant 9.99999974E-6 : f32
    %38 = vector.broadcast %cst_14 : f32 to vector<8x1xf32>
    %39 = arith.addf %37, %38 : vector<8x1xf32>
    %40 = math.rsqrt %39 : vector<8x1xf32>
    %41 = vector.broadcast %40 : vector<8x1xf32> to vector<8x896xf32>
    %42 = arith.mulf %32, %41 : vector<8x896xf32>
    %43 = vector.broadcast %9 : vector<8x1xf32> to vector<8x896xf32>
    %44 = arith.mulf %43, %42 : vector<8x896xf32>
    %45 = vector.broadcast %10 : vector<8x1xf32> to vector<8x896xf32>
    %46 = arith.addf %44, %45 : vector<8x896xf32>
    %cst_15 = arith.constant 0.000000e+00 : f32
    %47 = vector.broadcast %cst_15 : f32 to vector<8x896xf32>
    %48 = arith.select %14, %46, %47 : vector<8x896xi1>, vector<8x896xf32>
    %c1 = arith.constant 1 : index
    %c0_16 = arith.constant 0 : index
    %c0_17 = arith.constant 0 : index
    %49 = vector.load %arg1[%c1, %c0_16, %c0_17] : memref<3x8x16xf32, #tpu.memory_space<vmem>>, vector<1x8x16xf32>
    %50 = vector.shape_cast %49 : vector<1x8x16xf32> to vector<8x16xf32>
    %51 = vector.extract_strided_slice %50 {offsets = [0, 0], sizes = [8, 8], strides = [1, 1]} : vector<8x16xf32> to vector<8x8xf32>
    %52 = vector.extract_strided_slice %50 {offsets = [0, 8], sizes = [8, 1], strides = [1, 1]} : vector<8x16xf32> to vector<8x1xf32>
    %53 = vector.extract_strided_slice %50 {offsets = [0, 9], sizes = [8, 1], strides = [1, 1]} : vector<8x16xf32> to vector<8x1xf32>
    %54 = vector.extract_strided_slice %50 {offsets = [0, 10], sizes = [8, 1], strides = [1, 1]} : vector<8x16xf32> to vector<8x1xf32>
    %55 = vector.extract_strided_slice %50 {offsets = [0, 11], sizes = [8, 1], strides = [1, 1]} : vector<8x16xf32> to vector<8x1xf32>
    %cst_18 = arith.constant 3.000000e+00 : f32
    %56 = vector.broadcast %cst_18 : f32 to vector<8x896xf32>
    %57 = arith.cmpf oge, %3, %56 : vector<8x896xf32>
    %cst_19 = arith.constant 2.000000e+00 : f32
    %58 = vector.broadcast %cst_19 : f32 to vector<8x896xf32>
    %59 = arith.cmpf oge, %3, %58 : vector<8x896xf32>
    %cst_20 = arith.constant dense<0.000000e+00> : vector<8x896xf32>
    %60 = tpu.matmul %51, %48, %cst_20 {dimension_numbers = #tpu.dot_dimension_numbers<[1], [0], [0], [1], [0, 0, 1, 1], [], []>} : vector<8x8xf32>, vector<8x896xf32>, vector<8x896xf32> -> vector<8x896xf32>
    %61 = arith.addf %52, %53 : vector<8x1xf32>
    %62 = vector.shape_cast %61 : vector<8x1xf32> to vector<8x1xf32>
    %63 = vector.broadcast %62 : vector<8x1xf32> to vector<8x896xf32>
    %64 = vector.shape_cast %53 : vector<8x1xf32> to vector<8x1xf32>
    %65 = vector.broadcast %64 : vector<8x1xf32> to vector<8x896xf32>
    %66 = arith.select %57, %63, %65 : vector<8x896xi1>, vector<8x896xf32>
    %67 = arith.addf %60, %66 : vector<8x896xf32>
    %cst_21 = arith.constant 0.000000e+00 : f32
    %68 = vector.broadcast %cst_21 : f32 to vector<8x896xf32>
    %69 = arith.select %59, %67, %68 : vector<8x896xi1>, vector<8x896xf32>
    %cst_22 = arith.constant dense<0.000000e+00> : vector<8xf32>
    %70 = vector.multi_reduction <add>, %69, %cst_22 [1] : vector<8x896xf32> to vector<8xf32>
    %71 = vector.shape_cast %70 : vector<8xf32> to vector<8x1xf32>
    %cst_23 = arith.constant 0.00173611112 : f32
    %72 = vector.broadcast %cst_23 : f32 to vector<8x1xf32>
    %73 = arith.mulf %71, %72 : vector<8x1xf32>
    %74 = vector.broadcast %73 : vector<8x1xf32> to vector<8x896xf32>
    %75 = arith.subf %69, %74 : vector<8x896xf32>
    %cst_24 = arith.constant 0.000000e+00 : f32
    %76 = vector.broadcast %cst_24 : f32 to vector<8x896xf32>
    %77 = arith.select %59, %75, %76 : vector<8x896xi1>, vector<8x896xf32>
    %78 = arith.mulf %77, %77 : vector<8x896xf32>
    %cst_25 = arith.constant dense<0.000000e+00> : vector<8xf32>
    %79 = vector.multi_reduction <add>, %78, %cst_25 [1] : vector<8x896xf32> to vector<8xf32>
    %80 = vector.shape_cast %79 : vector<8xf32> to vector<8x1xf32>
    %cst_26 = arith.constant 0.00173611112 : f32
    %81 = vector.broadcast %cst_26 : f32 to vector<8x1xf32>
    %82 = arith.mulf %80, %81 : vector<8x1xf32>
    %cst_27 = arith.constant 9.99999974E-6 : f32
    %83 = vector.broadcast %cst_27 : f32 to vector<8x1xf32>
    %84 = arith.addf %82, %83 : vector<8x1xf32>
    %85 = math.rsqrt %84 : vector<8x1xf32>
    %86 = vector.broadcast %85 : vector<8x1xf32> to vector<8x896xf32>
    %87 = arith.mulf %77, %86 : vector<8x896xf32>
    %88 = vector.broadcast %54 : vector<8x1xf32> to vector<8x896xf32>
    %89 = arith.mulf %88, %87 : vector<8x896xf32>
    %90 = vector.broadcast %55 : vector<8x1xf32> to vector<8x896xf32>
    %91 = arith.addf %89, %90 : vector<8x896xf32>
    %cst_28 = arith.constant 0.000000e+00 : f32
    %92 = vector.broadcast %cst_28 : f32 to vector<8x896xf32>
    %93 = arith.select %59, %91, %92 : vector<8x896xi1>, vector<8x896xf32>
    %c2 = arith.constant 2 : index
    %c0_29 = arith.constant 0 : index
    %c0_30 = arith.constant 0 : index
    %94 = vector.load %arg1[%c2, %c0_29, %c0_30] : memref<3x8x16xf32, #tpu.memory_space<vmem>>, vector<1x8x16xf32>
    %95 = vector.shape_cast %94 : vector<1x8x16xf32> to vector<8x16xf32>
    %96 = vector.extract_strided_slice %95 {offsets = [0, 0], sizes = [8, 8], strides = [1, 1]} : vector<8x16xf32> to vector<8x8xf32>
    %97 = vector.extract_strided_slice %95 {offsets = [0, 8], sizes = [8, 1], strides = [1, 1]} : vector<8x16xf32> to vector<8x1xf32>
    %98 = vector.extract_strided_slice %95 {offsets = [0, 9], sizes = [8, 1], strides = [1, 1]} : vector<8x16xf32> to vector<8x1xf32>
    %99 = vector.extract_strided_slice %95 {offsets = [0, 10], sizes = [8, 1], strides = [1, 1]} : vector<8x16xf32> to vector<8x1xf32>
    %100 = vector.extract_strided_slice %95 {offsets = [0, 11], sizes = [8, 1], strides = [1, 1]} : vector<8x16xf32> to vector<8x1xf32>
    %cst_31 = arith.constant 1.000000e+00 : f32
    %101 = vector.broadcast %cst_31 : f32 to vector<8x896xf32>
    %102 = arith.cmpf oge, %3, %101 : vector<8x896xf32>
    %cst_32 = arith.constant 0.000000e+00 : f32
    %103 = vector.broadcast %cst_32 : f32 to vector<8x896xf32>
    %104 = arith.cmpf oge, %3, %103 : vector<8x896xf32>
    %cst_33 = arith.constant dense<0.000000e+00> : vector<8x896xf32>
    %105 = tpu.matmul %96, %93, %cst_33 {dimension_numbers = #tpu.dot_dimension_numbers<[1], [0], [0], [1], [0, 0, 1, 1], [], []>} : vector<8x8xf32>, vector<8x896xf32>, vector<8x896xf32> -> vector<8x896xf32>
    %106 = arith.addf %97, %98 : vector<8x1xf32>
    %107 = vector.shape_cast %106 : vector<8x1xf32> to vector<8x1xf32>
    %108 = vector.broadcast %107 : vector<8x1xf32> to vector<8x896xf32>
    %109 = vector.shape_cast %98 : vector<8x1xf32> to vector<8x1xf32>
    %110 = vector.broadcast %109 : vector<8x1xf32> to vector<8x896xf32>
    %111 = arith.select %102, %108, %110 : vector<8x896xi1>, vector<8x896xf32>
    %112 = arith.addf %105, %111 : vector<8x896xf32>
    %cst_34 = arith.constant 0.000000e+00 : f32
    %113 = vector.broadcast %cst_34 : f32 to vector<8x896xf32>
    %114 = arith.select %104, %112, %113 : vector<8x896xi1>, vector<8x896xf32>
    %cst_35 = arith.constant dense<0.000000e+00> : vector<8xf32>
    %115 = vector.multi_reduction <add>, %114, %cst_35 [1] : vector<8x896xf32> to vector<8xf32>
    %116 = vector.shape_cast %115 : vector<8xf32> to vector<8x1xf32>
    %cst_36 = arith.constant 0.00127551018 : f32
    %117 = vector.broadcast %cst_36 : f32 to vector<8x1xf32>
    %118 = arith.mulf %116, %117 : vector<8x1xf32>
    %119 = vector.broadcast %118 : vector<8x1xf32> to vector<8x896xf32>
    %120 = arith.subf %114, %119 : vector<8x896xf32>
    %cst_37 = arith.constant 0.000000e+00 : f32
    %121 = vector.broadcast %cst_37 : f32 to vector<8x896xf32>
    %122 = arith.select %104, %120, %121 : vector<8x896xi1>, vector<8x896xf32>
    %123 = arith.mulf %122, %122 : vector<8x896xf32>
    %cst_38 = arith.constant dense<0.000000e+00> : vector<8xf32>
    %124 = vector.multi_reduction <add>, %123, %cst_38 [1] : vector<8x896xf32> to vector<8xf32>
    %125 = vector.shape_cast %124 : vector<8xf32> to vector<8x1xf32>
    %cst_39 = arith.constant 0.00127551018 : f32
    %126 = vector.broadcast %cst_39 : f32 to vector<8x1xf32>
    %127 = arith.mulf %125, %126 : vector<8x1xf32>
    %cst_40 = arith.constant 9.99999974E-6 : f32
    %128 = vector.broadcast %cst_40 : f32 to vector<8x1xf32>
    %129 = arith.addf %127, %128 : vector<8x1xf32>
    %130 = math.rsqrt %129 : vector<8x1xf32>
    %131 = vector.broadcast %130 : vector<8x1xf32> to vector<8x896xf32>
    %132 = arith.mulf %122, %131 : vector<8x896xf32>
    %133 = vector.broadcast %99 : vector<8x1xf32> to vector<8x896xf32>
    %134 = arith.mulf %133, %132 : vector<8x896xf32>
    %135 = vector.broadcast %100 : vector<8x1xf32> to vector<8x896xf32>
    %136 = arith.addf %134, %135 : vector<8x896xf32>
    %c0_41 = arith.constant 0 : index
    %c0_42 = arith.constant 0 : index
    %137 = vector.load %arg3[%c0_41, %c0_42] : memref<8x896xf32, #tpu.memory_space<vmem>>, vector<8x896xf32>
    tpu.vector_store %arg3[%c0_41, %c0_42], %136 {strides = array<i32>} : memref<8x896xf32, #tpu.memory_space<vmem>>, vector<8x896xf32>,
    return
  }
}

</mosaic_0001>

<llo_original>
// kernel: model_forward_pallas.1
$region0: #{model_forward_pallas.1}
  #allocation0 [shape = 'u32[]', space=smem, size = 0x4, offset = 0x4, fixed_abs, tag = 'smem constant byte address 0x4 - core index']
  #allocation1 [shape = 'u32[144,128]{1,0:T(1,128)}', space=vmem, size = 0x12000, scoped, tag = 'internal scratch']
  %s0 = inlined_call_operand.vmem [shape: f32[8,896], index: 0, kind: input, shape index: {}, may-alias: {0,3}]
  %s1 = inlined_call_operand.vmem [shape: f32[3,8,16], index: 1, kind: input, shape index: {}]
  %s2 = inlined_call_operand.vmem [shape: f32[1,896], index: 2, kind: input, shape index: {}]
  %s3 = inlined_call_operand.vmem [shape: f32[8,896], index: 3, kind: output, shape index: {}, may-alias: {0,3}]
  %s4 = sld [smem:[#allocation0]]
  $region22: #{model_forward_pallas.1} parent=0
    _
  %s6 = ssub.s32 1, %s4
  %s7 = scalar_select 0, %s6, %s4
  // Predicated region
  $region2: #{model_forward_pallas.1} parent=0 // pred_check
    _
  $region3: #{model_forward_pallas.1} parent=0 // pred_check_branch
    %9 = sbr.rel (0) target = $region5
  $region4: #{model_forward_pallas.1} parent=0 // pred_region
    _
  $region5: #{model_forward_pallas.1} parent=0 // pred_fallthru
    _
  // Predicated region
  $region6: #{model_forward_pallas.1} parent=0 // pred_check
    _
  $region7: #{model_forward_pallas.1} parent=0 // pred_check_branch
    %11 = sbr.rel (0) target = $region9
  $region8: #{model_forward_pallas.1} parent=0 // pred_region
    _
  $region9: #{model_forward_pallas.1} parent=0 // pred_fallthru
    _
  // Predicated region
  $region10: #{model_forward_pallas.1} parent=0 // pred_check
    _
  $region11: #{model_forward_pallas.1} parent=0 // pred_check_branch
    %13 = sbr.rel (0) target = $region13
  $region12: #{model_forward_pallas.1} parent=0 // pred_region
    _
  $region13: #{model_forward_pallas.1} parent=0 // pred_fallthru
    _
  %v14 = vld [vmem:[%s0] sm:$0xff]
  %v15 = vld [vmem:[%s0 + $0x8] sm:$0xff]
  %v16 = vld [vmem:[%s0 + $0x10] sm:$0xff]
  %v17 = vld [vmem:[%s0 + $0x18] sm:$0xff]
  %v18 = vld [vmem:[%s0 + $0x20] sm:$0xff]
  %v19 = vld [vmem:[%s0 + $0x28] sm:$0xff]
  %v20 = vld [vmem:[%s0 + $0x30] sm:$0xff]
  %v21 = vld [vmem:[%s2] sm:$0xff]
  %v23 = vlaneseq
  %v24 = vshrl.u32 %v23, 7
  %v25 = vsub.s32 0, %v24
  %v26 = vrot.slane %v21, %v25
  %v27 = vlaneseq
  %v28 = vshrl.u32 %v27, 7
  %v29 = vsub.s32 1, %v28
  %v30 = vrot.slane %v21, %v29
  %v31 = vlaneseq
  %v32 = vshrl.u32 %v31, 7
  %v33 = vsub.s32 2, %v32
  %v34 = vrot.slane %v21, %v33
  %v35 = vlaneseq
  %v36 = vshrl.u32 %v35, 7
  %v37 = vsub.s32 3, %v36
  %v38 = vrot.slane %v21, %v37
  %v39 = vlaneseq
  %v40 = vshrl.u32 %v39, 7
  %v41 = vsub.s32 4, %v40
  %v42 = vrot.slane %v21, %v41
  %v43 = vlaneseq
  %v44 = vshrl.u32 %v43, 7
  %v45 = vsub.s32 5, %v44
  %v46 = vrot.slane %v21, %v45
  %v47 = vlaneseq
  %v48 = vshrl.u32 %v47, 7
  %v49 = vsub.s32 6, %v48
  %v50 = vrot.slane %v21, %v49
  %v58 = vld [vmem:[%s1] sm:$0xff]
  %vm59 = vcmp.ge.f32.partialorder %v26, 5.0
  %vm60 = vcmp.ge.f32.partialorder %v30, 5.0
  %vm61 = vcmp.ge.f32.partialorder %v34, 5.0
  %vm62 = vcmp.ge.f32.partialorder %v38, 5.0
  %vm63 = vcmp.ge.f32.partialorder %v42, 5.0
  %vm64 = vcmp.ge.f32.partialorder %v46, 5.0
  %vm65 = vcmp.ge.f32.partialorder %v50, 5.0
  %vm66 = vcmp.ge.f32.partialorder %v26, 4.0
  %vm67 = vcmp.ge.f32.partialorder %v30, 4.0
  %vm68 = vcmp.ge.f32.partialorder %v34, 4.0
  %vm69 = vcmp.ge.f32.partialorder %v38, 4.0
  %vm70 = vcmp.ge.f32.partialorder %v42, 4.0
  %vm71 = vcmp.ge.f32.partialorder %v46, 4.0
  %vm72 = vcmp.ge.f32.partialorder %v50, 4.0
  %74 = vrot.lane.b32.xlu0 %v58, 127
  %v75 = vpop.permute.xlu0 %74
  %v77 = vadd.f32 %v58, %v75
  %79 = vset.pattern.permute.xlu0 8
  %80 = vperm.xlu0 %79, %v77
  %v81 = vpop.permute.xlu0 %80
  %83 = vset.pattern.permute.xlu0 9
  %84 = vperm.xlu0 %83, %v58
  %v85 = vpop.permute.xlu0 %84
  %v87 = vsel %vm59, %v81, %v85
  %v88 = vsel %vm60, %v81, %v85
  %v89 = vsel %vm61, %v81, %v85
  %v90 = vsel %vm62, %v81, %v85
  %v91 = vsel %vm63, %v81, %v85
  %v92 = vsel %vm64, %v81, %v85
  %v93 = vsel %vm65, %v81, %v85
  %vm94 = vcmask 64512
  %v95 = vsel %vm94, %v58, 0
  %97 = vmatprep.subr.mxu0 %v15
  %98 = vmatpush1.msra.mxu0 %v14
  %99 = vmatprep.subr.mxu0 0.0
  %100 = vmatpush1.msra.mxu0 0.0
  %101 = vmatprep.subr.mxu0 0.0
  %102 = vmatpush1.msra.mxu0 0.0
  %103 = vmatprep.subr.mxu0 0.0
  %104 = vmatpush1.msra.mxu0 0.0
  %105 = vmatprep.subr.mxu0 0.0
  %106 = vmatpush1.msra.mxu0 0.0
  %107 = vmatprep.subr.mxu0 0.0
  %108 = vmatpush1.msra.mxu0 0.0
  %109 = vmatprep.subr.mxu0 0.0
  %110 = vmatpush1.msra.mxu0 0.0
  %111 = vmatprep.subr.mxu0 0.0
  %112 = vmatpush1.msra.mxu0 0.0
  %113 = vmatprep.subr.mxu0 0.0
  %114 = vmatpush1.msra.mxu0 0.0
  %115 = vmatprep.subr.mxu0 0.0
  %116 = vmatpush1.msra.mxu0 0.0
  %117 = vmatprep.subr.mxu0 0.0
  %118 = vmatpush1.msra.mxu0 0.0
  %119 = vmatprep.subr.mxu0 0.0
  %120 = vmatpush1.msra.mxu0 0.0
  %121 = vmatprep.subr.mxu0 0.0
  %122 = vmatpush1.msra.mxu0 0.0
  %123 = vmatprep.subr.mxu0 0.0
  %124 = vmatpush1.msra.mxu0 0.0
  %125 = vmatprep.subr.mxu0 0.0
  %126 = vmatpush1.msra.mxu0 0.0
  %127 = vmatprep.subr.mxu0 0.0
  %128 = vmatpush1.msra.mxu0 0.0
  %129 = vmatprep.subr.mxu0 0.0
  %130 = vmatpush1.msra.mxu0 0.0
  %131 = vmatprep.subr.mxu0 0.0
  %132 = vmatpush1.msra.mxu0 0.0
  %133 = vmatprep.subr.mxu0 0.0
  %134 = vmatpush1.msra.mxu0 0.0
  %135 = vmatprep.subr.mxu0 0.0
  %136 = vmatpush1.msra.mxu0 0.0
  %137 = vmatprep.subr.mxu0 0.0
  %138 = vmatpush1.msra.mxu0 0.0
  %139 = vmatprep.subr.mxu0 0.0
  %140 = vmatpush1.msra.mxu0 0.0
  %141 = vmatprep.subr.mxu0 0.0
  %142 = vmatpush1.msra.mxu0 0.0
  %143 = vmatprep.subr.mxu0 0.0
  %144 = vmatpush1.msra.mxu0 0.0
  %145 = vmatprep.subr.mxu0 0.0
  %146 = vmatpush1.msra.mxu0 0.0
  %147 = vmatprep.subr.mxu0 0.0
  %148 = vmatpush1.msra.mxu0 0.0
  %149 = vmatprep.subr.mxu0 0.0
  %150 = vmatpush1.msra.mxu0 0.0
  %151 = vmatprep.subr.mxu0 0.0
  %152 = vmatpush1.msra.mxu0 0.0
  %153 = vmatprep.subr.mxu0 0.0
  %154 = vmatpush1.msra.mxu0 0.0
  %155 = vmatprep.subr.mxu0 0.0
  %156 = vmatpush1.msra.mxu0 0.0
  %157 = vmatprep.subr.mxu0 0.0
  %158 = vmatpush1.msra.mxu0 0.0
  %159 = vmatprep.subr.mxu0 0.0
  %160 = vmatpush1.msra.mxu0 0.0
  %161 = vmatprep.mubr.f32.mxu0 0.0
  %162 = vmatmul.mubr.f32.gmra.mrb[0].mxu0 %v95
  %v163 = vpop.f32.mrb[0].mxu0
  %v164 = vadd.f32 %v87, %v163
  %v165 = vpop.f32.mrb[0].mxu0
  %v166 = vadd.f32 %v88, %v165
  %167 = vdwg.mxu0
  %168 = vmatprep.subr.mxu0 %v17
  %169 = vmatpush1.msra.mxu0 %v16
  %170 = vmatprep.subr.mxu0 0.0
  %171 = vmatpush1.msra.mxu0 0.0
  %172 = vmatprep.subr.mxu0 0.0
  %173 = vmatpush1.msra.mxu0 0.0
  %174 = vmatprep.subr.mxu0 0.0
  %175 = vmatpush1.msra.mxu0 0.0
  %176 = vmatprep.subr.mxu0 0.0
  %177 = vmatpush1.msra.mxu0 0.0
  %178 = vmatprep.subr.mxu0 0.0
  %179 = vmatpush1.msra.mxu0 0.0
  %180 = vmatprep.subr.mxu0 0.0
  %181 = vmatpush1.msra.mxu0 0.0
  %182 = vmatprep.subr.mxu0 0.0
  %183 = vmatpush1.msra.mxu0 0.0
  %184 = vmatprep.subr.mxu0 0.0
  %185 = vmatpush1.msra.mxu0 0.0
  %186 = vmatprep.subr.mxu0 0.0
  %187 = vmatpush1.msra.mxu0 0.0
  %188 = vmatprep.subr.mxu0 0.0
  %189 = vmatpush1.msra.mxu0 0.0
  %190 = vmatprep.subr.mxu0 0.0
  %191 = vmatpush1.msra.mxu0 0.0
  %192 = vmatprep.subr.mxu0 0.0
  %193 = vmatpush1.msra.mxu0 0.0
  %194 = vmatprep.subr.mxu0 0.0
  %195 = vmatpush1.msra.mxu0 0.0
  %196 = vmatprep.subr.mxu0 0.0
  %197 = vmatpush1.msra.mxu0 0.0
  %198 = vmatprep.subr.mxu0 0.0
  %199 = vmatpush1.msra.mxu0 0.0
  %200 = vmatprep.subr.mxu0 0.0
  %201 = vmatpush1.msra.mxu0 0.0
  %202 = vmatprep.subr.mxu0 0.0
  %203 = vmatpush1.msra.mxu0 0.0
  %204 = vmatprep.subr.mxu0 0.0
  %205 = vmatpush1.msra.mxu0 0.0
  %206 = vmatprep.subr.mxu0 0.0
  %207 = vmatpush1.msra.mxu0 0.0
  %208 = vmatprep.subr.mxu0 0.0
  %209 = vmatpush1.msra.mxu0 0.0
  %210 = vmatprep.subr.mxu0 0.0
  %211 = vmatpush1.msra.mxu0 0.0
  %212 = vmatprep.subr.mxu0 0.0
  %213 = vmatpush1.msra.mxu0 0.0
  %214 = vmatprep.subr.mxu0 0.0
  %215 = vmatpush1.msra.mxu0 0.0
  %216 = vmatprep.subr.mxu0 0.0
  %217 = vmatpush1.msra.mxu0 0.0
  %218 = vmatprep.subr.mxu0 0.0
  %219 = vmatpush1.msra.mxu0 0.0
  %220 = vmatprep.subr.mxu0 0.0
  %221 = vmatpush1.msra.mxu0 0.0
  %222 = vmatprep.subr.mxu0 0.0
  %223 = vmatpush1.msra.mxu0 0.0
  %224 = vmatprep.subr.mxu0 0.0
  %225 = vmatpush1.msra.mxu0 0.0
  %226 = vmatprep.subr.mxu0 0.0
  %227 = vmatpush1.msra.mxu0 0.0
  %228 = vmatprep.subr.mxu0 0.0
  %229 = vmatpush1.msra.mxu0 0.0
  %230 = vmatprep.subr.mxu0 0.0
  %231 = vmatpush1.msra.mxu0 0.0
  %232 = vmatprep.mubr.f32.mxu0 0.0
  %233 = vmatmul.mubr.f32.gmra.mrb[0].mxu0 %v95
  %v234 = vpop.f32.mrb[0].mxu0
  %v235 = vadd.f32 %v89, %v234
  %v236 = vpop.f32.mrb[0].mxu0
  %v237 = vadd.f32 %v90, %v236
  %238 = vdwg.mxu0
  %239 = vmatprep.subr.mxu0 %v19
  %240 = vmatpush1.msra.mxu0 %v18
  %241 = vmatprep.subr.mxu0 0.0
  %242 = vmatpush1.msra.mxu0 0.0
  %243 = vmatprep.subr.mxu0 0.0
  %244 = vmatpush1.msra.mxu0 0.0
  %245 = vmatprep.subr.mxu0 0.0
  %246 = vmatpush1.msra.mxu0 0.0
  %247 = vmatprep.subr.mxu0 0.0
  %248 = vmatpush1.msra.mxu0 0.0
  %249 = vmatprep.subr.mxu0 0.0
  %250 = vmatpush1.msra.mxu0 0.0
  %251 = vmatprep.subr.mxu0 0.0
  %252 = vmatpush1.msra.mxu0 0.0
  %253 = vmatprep.subr.mxu0 0.0
  %254 = vmatpush1.msra.mxu0 0.0
  %255 = vmatprep.subr.mxu0 0.0
  %256 = vmatpush1.msra.mxu0 0.0
  %257 = vmatprep.subr.mxu0 0.0
  %258 = vmatpush1.msra.mxu0 0.0
  %259 = vmatprep.subr.mxu0 0.0
  %260 = vmatpush1.msra.mxu0 0.0
  %261 = vmatprep.subr.mxu0 0.0
  %262 = vmatpush1.msra.mxu0 0.0
  %263 = vmatprep.subr.mxu0 0.0
  %264 = vmatpush1.msra.mxu0 0.0
  %265 = vmatprep.subr.mxu0 0.0
  %266 = vmatpush1.msra.mxu0 0.0
  %267 = vmatprep.subr.mxu0 0.0
  %268 = vmatpush1.msra.mxu0 0.0
  %269 = vmatprep.subr.mxu0 0.0
  %270 = vmatpush1.msra.mxu0 0.0
  %271 = vmatprep.subr.mxu0 0.0
  %272 = vmatpush1.msra.mxu0 0.0
  %273 = vmatprep.subr.mxu0 0.0
  %274 = vmatpush1.msra.mxu0 0.0
  %275 = vmatprep.subr.mxu0 0.0
  %276 = vmatpush1.msra.mxu0 0.0
  %277 = vmatprep.subr.mxu0 0.0
  %278 = vmatpush1.msra.mxu0 0.0
  %279 = vmatprep.subr.mxu0 0.0
  %280 = vmatpush1.msra.mxu0 0.0
  %281 = vmatprep.subr.mxu0 0.0
  %282 = vmatpush1.msra.mxu0 0.0
  %283 = vmatprep.subr.mxu0 0.0
  %284 = vmatpush1.msra.mxu0 0.0
  %285 = vmatprep.subr.mxu0 0.0
  %286 = vmatpush1.msra.mxu0 0.0
  %287 = vmatprep.subr.mxu0 0.0
  %288 = vmatpush1.msra.mxu0 0.0
  %289 = vmatprep.subr.mxu0 0.0
  %290 = vmatpush1.msra.mxu0 0.0
  %291 = vmatprep.subr.mxu0 0.0
  %292 = vmatpush1.msra.mxu0 0.0
  %293 = vmatprep.subr.mxu0 0.0
  %294 = vmatpush1.msra.mxu0 0.0
  %295 = vmatprep.subr.mxu0 0.0
  %296 = vmatpush1.msra.mxu0 0.0
  %297 = vmatprep.subr.mxu0 0.0
  %298 = vmatpush1.msra.mxu0 0.0
  %299 = vmatprep.subr.mxu0 0.0
  %300 = vmatpush1.msra.mxu0 0.0
  %301 = vmatprep.subr.mxu0 0.0
  %302 = vmatpush1.msra.mxu0 0.0
  %303 = vmatprep.mubr.f32.mxu0 0.0
  %304 = vmatmul.mubr.f32.gmra.mrb[0].mxu0 %v95
  %v305 = vpop.f32.mrb[0].mxu0
  %v306 = vadd.f32 %v91, %v305
  %v307 = vpop.f32.mrb[0].mxu0
  %v308 = vadd.f32 %v92, %v307
  %309 = vdwg.mxu0
  %310 = vmatprep.subr.mxu0 0.0
  %311 = vmatpush1.msra.mxu0 %v20
  %312 = vmatprep.subr.mxu0 0.0
  %313 = vmatpush1.msra.mxu0 0.0
  %314 = vmatprep.subr.mxu0 0.0
  %315 = vmatpush1.msra.mxu0 0.0
  %316 = vmatprep.subr.mxu0 0.0
  %317 = vmatpush1.msra.mxu0 0.0
  %318 = vmatprep.subr.mxu0 0.0
  %319 = vmatpush1.msra.mxu0 0.0
  %320 = vmatprep.subr.mxu0 0.0
  %321 = vmatpush1.msra.mxu0 0.0
  %322 = vmatprep.subr.mxu0 0.0
  %323 = vmatpush1.msra.mxu0 0.0
  %324 = vmatprep.subr.mxu0 0.0
  %325 = vmatpush1.msra.mxu0 0.0
  %326 = vmatprep.subr.mxu0 0.0
  %327 = vmatpush1.msra.mxu0 0.0
  %328 = vmatprep.subr.mxu0 0.0
  %329 = vmatpush1.msra.mxu0 0.0
  %330 = vmatprep.subr.mxu0 0.0
  %331 = vmatpush1.msra.mxu0 0.0
  %332 = vmatprep.subr.mxu0 0.0
  %333 = vmatpush1.msra.mxu0 0.0
  %334 = vmatprep.subr.mxu0 0.0
  %335 = vmatpush1.msra.mxu0 0.0
  %336 = vmatprep.subr.mxu0 0.0
  %337 = vmatpush1.msra.mxu0 0.0
  %338 = vmatprep.subr.mxu0 0.0
  %339 = vmatpush1.msra.mxu0 0.0
  %340 = vmatprep.subr.mxu0 0.0
  %341 = vmatpush1.msra.mxu0 0.0
  %342 = vmatprep.subr.mxu0 0.0
  %343 = vmatpush1.msra.mxu0 0.0
  %344 = vmatprep.subr.mxu0 0.0
  %345 = vmatpush1.msra.mxu0 0.0
  %346 = vmatprep.subr.mxu0 0.0
  %347 = vmatpush1.msra.mxu0 0.0
  %348 = vmatprep.subr.mxu0 0.0
  %349 = vmatpush1.msra.mxu0 0.0
  %350 = vmatprep.subr.mxu0 0.0
  %351 = vmatpush1.msra.mxu0 0.0
  %352 = vmatprep.subr.mxu0 0.0
  %353 = vmatpush1.msra.mxu0 0.0
  %354 = vmatprep.subr.mxu0 0.0
  %355 = vmatpush1.msra.mxu0 0.0
  %356 = vmatprep.subr.mxu0 0.0
  %357 = vmatpush1.msra.mxu0 0.0
  %358 = vmatprep.subr.mxu0 0.0
  %359 = vmatpush1.msra.mxu0 0.0
  %360 = vmatprep.subr.mxu0 0.0
  %361 = vmatpush1.msra.mxu0 0.0
  %362 = vmatprep.subr.mxu0 0.0
  %363 = vmatpush1.msra.mxu0 0.0
  %364 = vmatprep.subr.mxu0 0.0
  %365 = vmatpush1.msra.mxu0 0.0
  %366 = vmatprep.subr.mxu0 0.0
  %367 = vmatpush1.msra.mxu0 0.0
  %368 = vmatprep.subr.mxu0 0.0
  %369 = vmatpush1.msra.mxu0 0.0
  %370 = vmatprep.subr.mxu0 0.0
  %371 = vmatpush1.msra.mxu0 0.0
  %372 = vmatprep.subr.mxu0 0.0
  %373 = vmatpush1.msra.mxu0 0.0
  %374 = vmatprep.mubr.f32.mxu0 0.0
  %375 = vmatmul.mubr.f32.gmra.mrb[0].mxu0 %v95
  %v376 = vpop.f32.mrb[0].mxu0
  %v377 = vadd.f32 %v93, %v376
  %v378 = vpop.f32.mrb[0].mxu0
  %379 = vdwg.mxu0
  %v380 = vsel %vm66, %v164, 0.0
  %v381 = vsel %vm67, %v166, 0.0
  %v382 = vsel %vm68, %v235, 0.0
  %v383 = vsel %vm69, %v237, 0.0
  %v384 = vsel %vm70, %v306, 0.0
  %v385 = vsel %vm71, %v308, 0.0
  %v386 = vsel %vm72, %v377, 0.0
  %v387 = vadd.f32 %v380, %v381
  %v388 = vadd.f32 %v387, %v382
  %v389 = vadd.f32 %v388, %v383
  %v390 = vadd.f32 %v389, %v384
  %v391 = vadd.f32 %v390, %v385
  %v392 = vadd.f32 %v391, %v386
  %393 = vadd.xlane.f32.xlu0 %v392
  %v394 = vpop.xlane.xlu0 %393
  %v395 = vmul.f32 %v394, 0.0025
  %v396 = vsub.f32 %v380, %v395
  %v397 = vsub.f32 %v381, %v395
  %v398 = vsub.f32 %v382, %v395
  %v399 = vsub.f32 %v383, %v395
  %v400 = vsub.f32 %v384, %v395
  %v401 = vsub.f32 %v385, %v395
  %v402 = vsub.f32 %v386, %v395
  %v403 = vsel %vm66, %v396, 0.0
  %v404 = vsel %vm67, %v397, 0.0
  %v405 = vsel %vm68, %v398, 0.0
  %v406 = vsel %vm69, %v399, 0.0
  %v407 = vsel %vm70, %v400, 0.0
  %v408 = vsel %vm71, %v401, 0.0
  %v409 = vsel %vm72, %v402, 0.0
  %v410 = vmul.f32 %v403, %v403
  %v411 = vmul.f32 %v404, %v404
  %v412 = vmul.f32 %v405, %v405
  %v413 = vmul.f32 %v406, %v406
  %v414 = vmul.f32 %v407, %v407
  %v415 = vmul.f32 %v408, %v408
  %v416 = vmul.f32 %v409, %v409
  %v417 = vadd.f32 %v410, %v411
  %v418 = vadd.f32 %v417, %v412
  %v419 = vadd.f32 %v418, %v413
  %v420 = vadd.f32 %v419, %v414
  %v421 = vadd.f32 %v420, %v415
  %v422 = vadd.f32 %v421, %v416
  %423 = vadd.xlane.f32.xlu0 %v422
  %v424 = vpop.xlane.xlu0 %423
  %v425 = vmul.f32 %v424, 0.0025
  %v426 = vadd.f32 %v425, 1e-05
  %v427 = vrsqrt.pop %v426
  %v428 = vmul.f32 %v403, %v427
  %v429 = vmul.f32 %v404, %v427
  %v430 = vmul.f32 %v405, %v427
  %v431 = vmul.f32 %v406, %v427
  %v432 = vmul.f32 %v407, %v427
  %v433 = vmul.f32 %v408, %v427
  %v434 = vmul.f32 %v409, %v427
  %435 = vset.pattern.permute.xlu0 10
  %436 = vperm.xlu0 %435, %v58
  %v437 = vpop.permute.xlu0 %436
  %v439 = vmul.f32 %v437, %v428
  %v440 = vmul.f32 %v437, %v429
  %v441 = vmul.f32 %v437, %v430
  %v442 = vmul.f32 %v437, %v431
  %v443 = vmul.f32 %v437, %v432
  %v444 = vmul.f32 %v437, %v433
  %v445 = vmul.f32 %v437, %v434
  %446 = vset.pattern.permute.xlu0 11
  %447 = vperm.xlu0 %446, %v58
  %v448 = vpop.permute.xlu0 %447
  %v450 = vadd.f32 %v439, %v448
  %v451 = vadd.f32 %v440, %v448
  %v452 = vadd.f32 %v441, %v448
  %v453 = vadd.f32 %v442, %v448
  %v454 = vadd.f32 %v443, %v448
  %v455 = vadd.f32 %v444, %v448
  %v456 = vadd.f32 %v445, %v448
  %v457 = vsel %vm66, %v450, 0.0
  %v458 = vsel %vm67, %v451, 0.0
  %v459 = vsel %vm68, %v452, 0.0
  %v460 = vsel %vm69, %v453, 0.0
  %v461 = vsel %vm70, %v454, 0.0
  %v462 = vsel %vm71, %v455, 0.0
  %v463 = vsel %vm72, %v456, 0.0
  %s464 = scalar_lea.vmem %s1, 8
  %v465 = vld [vmem:[%s464] sm:$0xff]
  %vm466 = vcmp.ge.f32.partialorder %v26, 3.0
  %vm467 = vcmp.ge.f32.partialorder %v30, 3.0
  %vm468 = vcmp.ge.f32.partialorder %v34, 3.0
  %vm469 = vcmp.ge.f32.partialorder %v38, 3.0
  %vm470 = vcmp.ge.f32.partialorder %v42, 3.0
  %vm471 = vcmp.ge.f32.partialorder %v46, 3.0
  %vm472 = vcmp.ge.f32.partialorder %v50, 3.0
  %vm473 = vcmp.ge.f32.partialorder %v26, 2.0
  %vm474 = vcmp.ge.f32.partialorder %v30, 2.0
  %vm475 = vcmp.ge.f32.partialorder %v34, 2.0
  %vm476 = vcmp.ge.f32.partialorder %v38, 2.0
  %vm477 = vcmp.ge.f32.partialorder %v42, 2.0
  %vm478 = vcmp.ge.f32.partialorder %v46, 2.0
  %vm479 = vcmp.ge.f32.partialorder %v50, 2.0
  %481 = vrot.lane.b32.xlu0 %v465, 127
  %v482 = vpop.permute.xlu0 %481
  %v484 = vadd.f32 %v465, %v482
  %486 = vset.pattern.permute.xlu0 8
  %487 = vperm.xlu0 %486, %v484
  %v488 = vpop.permute.xlu0 %487
  %490 = vset.pattern.permute.xlu0 9
  %491 = vperm.xlu0 %490, %v465
  %v492 = vpop.permute.xlu0 %491
  %v494 = vsel %vm466, %v488, %v492
  %v495 = vsel %vm467, %v488, %v492
  %v496 = vsel %vm468, %v488, %v492
  %v497 = vsel %vm469, %v488, %v492
  %v498 = vsel %vm470, %v488, %v492
  %v499 = vsel %vm471, %v488, %v492
  %v500 = vsel %vm472, %v488, %v492
  %v501 = vsel %vm94, %v465, 0
  %503 = vmatprep.subr.mxu0 %v458
  %504 = vmatpush1.msra.mxu0 %v457
  %505 = vmatprep.subr.mxu0 0.0
  %506 = vmatpush1.msra.mxu0 0.0
  %507 = vmatprep.subr.mxu0 0.0
  %508 = vmatpush1.msra.mxu0 0.0
  %509 = vmatprep.subr.mxu0 0.0
  %510 = vmatpush1.msra.mxu0 0.0
  %511 = vmatprep.subr.mxu0 0.0
  %512 = vmatpush1.msra.mxu0 0.0
  %513 = vmatprep.subr.mxu0 0.0
  %514 = vmatpush1.msra.mxu0 0.0
  %515 = vmatprep.subr.mxu0 0.0
  %516 = vmatpush1.msra.mxu0 0.0
  %517 = vmatprep.subr.mxu0 0.0
  %518 = vmatpush1.msra.mxu0 0.0
  %519 = vmatprep.subr.mxu0 0.0
  %520 = vmatpush1.msra.mxu0 0.0
  %521 = vmatprep.subr.mxu0 0.0
  %522 = vmatpush1.msra.mxu0 0.0
  %523 = vmatprep.subr.mxu0 0.0
  %524 = vmatpush1.msra.mxu0 0.0
  %525 = vmatprep.subr.mxu0 0.0
  %526 = vmatpush1.msra.mxu0 0.0
  %527 = vmatprep.subr.mxu0 0.0
  %528 = vmatpush1.msra.mxu0 0.0
  %529 = vmatprep.subr.mxu0 0.0
  %530 = vmatpush1.msra.mxu0 0.0
  %531 = vmatprep.subr.mxu0 0.0
  %532 = vmatpush1.msra.mxu0 0.0
  %533 = vmatprep.subr.mxu0 0.0
  %534 = vmatpush1.msra.mxu0 0.0
  %535 = vmatprep.subr.mxu0 0.0
  %536 = vmatpush1.msra.mxu0 0.0
  %537 = vmatprep.subr.mxu0 0.0
  %538 = vmatpush1.msra.mxu0 0.0
  %539 = vmatprep.subr.mxu0 0.0
  %540 = vmatpush1.msra.mxu0 0.0
  %541 = vmatprep.subr.mxu0 0.0
  %542 = vmatpush1.msra.mxu0 0.0
  %543 = vmatprep.subr.mxu0 0.0
  %544 = vmatpush1.msra.mxu0 0.0
  %545 = vmatprep.subr.mxu0 0.0
  %546 = vmatpush1.msra.mxu0 0.0
  %547 = vmatprep.subr.mxu0 0.0
  %548 = vmatpush1.msra.mxu0 0.0
  %549 = vmatprep.subr.mxu0 0.0
  %550 = vmatpush1.msra.mxu0 0.0
  %551 = vmatprep.subr.mxu0 0.0
  %552 = vmatpush1.msra.mxu0 0.0
  %553 = vmatprep.subr.mxu0 0.0
  %554 = vmatpush1.msra.mxu0 0.0
  %555 = vmatprep.subr.mxu0 0.0
  %556 = vmatpush1.msra.mxu0 0.0
  %557 = vmatprep.subr.mxu0 0.0
  %558 = vmatpush1.msra.mxu0 0.0
  %559 = vmatprep.subr.mxu0 0.0
  %560 = vmatpush1.msra.mxu0 0.0
  %561 = vmatprep.subr.mxu0 0.0
  %562 = vmatpush1.msra.mxu0 0.0
  %563 = vmatprep.subr.mxu0 0.0
  %564 = vmatpush1.msra.mxu0 0.0
  %565 = vmatprep.subr.mxu0 0.0
  %566 = vmatpush1.msra.mxu0 0.0
  %567 = vmatprep.mubr.f32.mxu0 0.0
  %568 = vmatmul.mubr.f32.gmra.mrb[0].mxu0 %v501
  %v569 = vpop.f32.mrb[0].mxu0
  %v570 = vadd.f32 %v494, %v569
  %v571 = vpop.f32.mrb[0].mxu0
  %v572 = vadd.f32 %v495, %v571
  %573 = vdwg.mxu0
  %574 = vmatprep.subr.mxu0 %v460
  %575 = vmatpush1.msra.mxu0 %v459
  %576 = vmatprep.subr.mxu0 0.0
  %577 = vmatpush1.msra.mxu0 0.0
  %578 = vmatprep.subr.mxu0 0.0
  %579 = vmatpush1.msra.mxu0 0.0
  %580 = vmatprep.subr.mxu0 0.0
  %581 = vmatpush1.msra.mxu0 0.0
  %582 = vmatprep.subr.mxu0 0.0
  %583 = vmatpush1.msra.mxu0 0.0
  %584 = vmatprep.subr.mxu0 0.0
  %585 = vmatpush1.msra.mxu0 0.0
  %586 = vmatprep.subr.mxu0 0.0
  %587 = vmatpush1.msra.mxu0 0.0
  %588 = vmatprep.subr.mxu0 0.0
  %589 = vmatpush1.msra.mxu0 0.0
  %590 = vmatprep.subr.mxu0 0.0
  %591 = vmatpush1.msra.mxu0 0.0
  %592 = vmatprep.subr.mxu0 0.0
  %593 = vmatpush1.msra.mxu0 0.0
  %594 = vmatprep.subr.mxu0 0.0
  %595 = vmatpush1.msra.mxu0 0.0
  %596 = vmatprep.subr.mxu0 0.0
  %597 = vmatpush1.msra.mxu0 0.0
  %598 = vmatprep.subr.mxu0 0.0
  %599 = vmatpush1.msra.mxu0 0.0
  %600 = vmatprep.subr.mxu0 0.0
  %601 = vmatpush1.msra.mxu0 0.0
  %602 = vmatprep.subr.mxu0 0.0
  %603 = vmatpush1.msra.mxu0 0.0
  %604 = vmatprep.subr.mxu0 0.0
  %605 = vmatpush1.msra.mxu0 0.0
  %606 = vmatprep.subr.mxu0 0.0
  %607 = vmatpush1.msra.mxu0 0.0
  %608 = vmatprep.subr.mxu0 0.0
  %609 = vmatpush1.msra.mxu0 0.0
  %610 = vmatprep.subr.mxu0 0.0
  %611 = vmatpush1.msra.mxu0 0.0
  %612 = vmatprep.subr.mxu0 0.0
  %613 = vmatpush1.msra.mxu0 0.0
  %614 = vmatprep.subr.mxu0 0.0
  %615 = vmatpush1.msra.mxu0 0.0
  %616 = vmatprep.subr.mxu0 0.0
  %617 = vmatpush1.msra.mxu0 0.0
  %618 = vmatprep.subr.mxu0 0.0
  %619 = vmatpush1.msra.mxu0 0.0
  %620 = vmatprep.subr.mxu0 0.0
  %621 = vmatpush1.msra.mxu0 0.0
  %622 = vmatprep.subr.mxu0 0.0
  %623 = vmatpush1.msra.mxu0 0.0
  %624 = vmatprep.subr.mxu0 0.0
  %625 = vmatpush1.msra.mxu0 0.0
  %626 = vmatprep.subr.mxu0 0.0
  %627 = vmatpush1.msra.mxu0 0.0
  %628 = vmatprep.subr.mxu0 0.0
  %629 = vmatpush1.msra.mxu0 0.0
  %630 = vmatprep.subr.mxu0 0.0
  %631 = vmatpush1.msra.mxu0 0.0
  %632 = vmatprep.subr.mxu0 0.0
  %633 = vmatpush1.msra.mxu0 0.0
  %634 = vmatprep.subr.mxu0 0.0
  %635 = vmatpush1.msra.mxu0 0.0
  %636 = vmatprep.subr.mxu0 0.0
  %637 = vmatpush1.msra.mxu0 0.0
  %638 = vmatprep.mubr.f32.mxu0 0.0
  %639 = vmatmul.mubr.f32.gmra.mrb[0].mxu0 %v501
  %v640 = vpop.f32.mrb[0].mxu0
  %v641 = vadd.f32 %v496, %v640
  %v642 = vpop.f32.mrb[0].mxu0
  %v643 = vadd.f32 %v497, %v642
  %644 = vdwg.mxu0
  %645 = vmatprep.subr.mxu0 %v462
  %646 = vmatpush1.msra.mxu0 %v461
  %647 = vmatprep.subr.mxu0 0.0
  %648 = vmatpush1.msra.mxu0 0.0
  %649 = vmatprep.subr.mxu0 0.0
  %650 = vmatpush1.msra.mxu0 0.0
  %651 = vmatprep.subr.mxu0 0.0
  %652 = vmatpush1.msra.mxu0 0.0
  %653 = vmatprep.subr.mxu0 0.0
  %654 = vmatpush1.msra.mxu0 0.0
  %655 = vmatprep.subr.mxu0 0.0
  %656 = vmatpush1.msra.mxu0 0.0
  %657 = vmatprep.subr.mxu0 0.0
  %658 = vmatpush1.msra.mxu0 0.0
  %659 = vmatprep.subr.mxu0 0.0
  %660 = vmatpush1.msra.mxu0 0.0
  %661 = vmatprep.subr.mxu0 0.0
  %662 = vmatpush1.msra.mxu0 0.0
  %663 = vmatprep.subr.mxu0 0.0
  %664 = vmatpush1.msra.mxu0 0.0
  %665 = vmatprep.subr.mxu0 0.0
  %666 = vmatpush1.msra.mxu0 0.0
  %667 = vmatprep.subr.mxu0 0.0
  %668 = vmatpush1.msra.mxu0 0.0
  %669 = vmatprep.subr.mxu0 0.0
  %670 = vmatpush1.msra.mxu0 0.0
  %671 = vmatprep.subr.mxu0 0.0
  %672 = vmatpush1.msra.mxu0 0.0
  %673 = vmatprep.subr.mxu0 0.0
  %674 = vmatpush1.msra.mxu0 0.0
  %675 = vmatprep.subr.mxu0 0.0
  %676 = vmatpush1.msra.mxu0 0.0
  %677 = vmatprep.subr.mxu0 0.0
  %678 = vmatpush1.msra.mxu0 0.0
  %679 = vmatprep.subr.mxu0 0.0
  %680 = vmatpush1.msra.mxu0 0.0
  %681 = vmatprep.subr.mxu0 0.0
  %682 = vmatpush1.msra.mxu0 0.0
  %683 = vmatprep.subr.mxu0 0.0
  %684 = vmatpush1.msra.mxu0 0.0
  %685 = vmatprep.subr.mxu0 0.0
  %686 = vmatpush1.msra.mxu0 0.0
  %687 = vmatprep.subr.mxu0 0.0
  %688 = vmatpush1.msra.mxu0 0.0
  %689 = vmatprep.subr.mxu0 0.0
  %690 = vmatpush1.msra.mxu0 0.0
  %691 = vmatprep.subr.mxu0 0.0
  %692 = vmatpush1.msra.mxu0 0.0
  %693 = vmatprep.subr.mxu0 0.0
  %694 = vmatpush1.msra.mxu0 0.0
  %695 = vmatprep.subr.mxu0 0.0
  %696 = vmatpush1.msra.mxu0 0.0
  %697 = vmatprep.subr.mxu0 0.0
  %698 = vmatpush1.msra.mxu0 0.0
  %699 = vmatprep.subr.mxu0 0.0
  %700 = vmatpush1.msra.mxu0 0.0
  %701 = vmatprep.subr.mxu0 0.0
  %702 = vmatpush1.msra.mxu0 0.0
  %703 = vmatprep.subr.mxu0 0.0
  %704 = vmatpush1.msra.mxu0 0.0
  %705 = vmatprep.subr.mxu0 0.0
  %706 = vmatpush1.msra.mxu0 0.0
  %707 = vmatprep.subr.mxu0 0.0
  %708 = vmatpush1.msra.mxu0 0.0
  %709 = vmatprep.mubr.f32.mxu0 0.0
  %710 = vmatmul.mubr.f32.gmra.mrb[0].mxu0 %v501
  %v711 = vpop.f32.mrb[0].mxu0
  %v712 = vadd.f32 %v498, %v711
  %v713 = vpop.f32.mrb[0].mxu0
  %v714 = vadd.f32 %v499, %v713
  %715 = vdwg.mxu0
  %716 = vmatprep.subr.mxu0 0.0
  %717 = vmatpush1.msra.mxu0 %v463
  %718 = vmatprep.subr.mxu0 0.0
  %719 = vmatpush1.msra.mxu0 0.0
  %720 = vmatprep.subr.mxu0 0.0
  %721 = vmatpush1.msra.mxu0 0.0
  %722 = vmatprep.subr.mxu0 0.0
  %723 = vmatpush1.msra.mxu0 0.0
  %724 = vmatprep.subr.mxu0 0.0
  %725 = vmatpush1.msra.mxu0 0.0
  %726 = vmatprep.subr.mxu0 0.0
  %727 = vmatpush1.msra.mxu0 0.0
  %728 = vmatprep.subr.mxu0 0.0
  %729 = vmatpush1.msra.mxu0 0.0
  %730 = vmatprep.subr.mxu0 0.0
  %731 = vmatpush1.msra.mxu0 0.0
  %732 = vmatprep.subr.mxu0 0.0
  %733 = vmatpush1.msra.mxu0 0.0
  %734 = vmatprep.subr.mxu0 0.0
  %735 = vmatpush1.msra.mxu0 0.0
  %736 = vmatprep.subr.mxu0 0.0
  %737 = vmatpush1.msra.mxu0 0.0
  %738 = vmatprep.subr.mxu0 0.0
  %739 = vmatpush1.msra.mxu0 0.0
  %740 = vmatprep.subr.mxu0 0.0
  %741 = vmatpush1.msra.mxu0 0.0
  %742 = vmatprep.subr.mxu0 0.0
  %743 = vmatpush1.msra.mxu0 0.0
  %744 = vmatprep.subr.mxu0 0.0
  %745 = vmatpush1.msra.mxu0 0.0
  %746 = vmatprep.subr.mxu0 0.0
  %747 = vmatpush1.msra.mxu0 0.0
  %748 = vmatprep.subr.mxu0 0.0
  %749 = vmatpush1.msra.mxu0 0.0
  %750 = vmatprep.subr.mxu0 0.0
  %751 = vmatpush1.msra.mxu0 0.0
  %752 = vmatprep.subr.mxu0 0.0
  %753 = vmatpush1.msra.mxu0 0.0
  %754 = vmatprep.subr.mxu0 0.0
  %755 = vmatpush1.msra.mxu0 0.0
  %756 = vmatprep.subr.mxu0 0.0
  %757 = vmatpush1.msra.mxu0 0.0
  %758 = vmatprep.subr.mxu0 0.0
  %759 = vmatpush1.msra.mxu0 0.0
  %760 = vmatprep.subr.mxu0 0.0
  %761 = vmatpush1.msra.mxu0 0.0
  %762 = vmatprep.subr.mxu0 0.0
  %763 = vmatpush1.msra.mxu0 0.0
  %764 = vmatprep.subr.mxu0 0.0
  %765 = vmatpush1.msra.mxu0 0.0
  %766 = vmatprep.subr.mxu0 0.0
  %767 = vmatpush1.msra.mxu0 0.0
  %768 = vmatprep.subr.mxu0 0.0
  %769 = vmatpush1.msra.mxu0 0.0
  %770 = vmatprep.subr.mxu0 0.0
  %771 = vmatpush1.msra.mxu0 0.0
  %772 = vmatprep.subr.mxu0 0.0
  %773 = vmatpush1.msra.mxu0 0.0
  %774 = vmatprep.subr.mxu0 0.0
  %775 = vmatpush1.msra.mxu0 0.0
  %776 = vmatprep.subr.mxu0 0.0
  %777 = vmatpush1.msra.mxu0 0.0
  %778 = vmatprep.subr.mxu0 0.0
  %779 = vmatpush1.msra.mxu0 0.0
  %780 = vmatprep.mubr.f32.mxu0 0.0
  %781 = vmatmul.mubr.f32.gmra.mrb[0].mxu0 %v501
  %v782 = vpop.f32.mrb[0].mxu0
  %v783 = vadd.f32 %v500, %v782
  %v784 = vpop.f32.mrb[0].mxu0
  %785 = vdwg.mxu0
  %v786 = vsel %vm473, %v570, 0.0
  %v787 = vsel %vm474, %v572, 0.0
  %v788 = vsel %vm475, %v641, 0.0
  %v789 = vsel %vm476, %v643, 0.0
  %v790 = vsel %vm477, %v712, 0.0
  %v791 = vsel %vm478, %v714, 0.0
  %v792 = vsel %vm479, %v783, 0.0
  %v793 = vadd.f32 %v786, %v787
  %v794 = vadd.f32 %v793, %v788
  %v795 = vadd.f32 %v794, %v789
  %v796 = vadd.f32 %v795, %v790
  %v797 = vadd.f32 %v796, %v791
  %v798 = vadd.f32 %v797, %v792
  %799 = vadd.xlane.f32.xlu0 %v798
  %v800 = vpop.xlane.xlu0 %799
  %v801 = vmul.f32 %v800, 0.0017361111
  %v802 = vsub.f32 %v786, %v801
  %v803 = vsub.f32 %v787, %v801
  %v804 = vsub.f32 %v788, %v801
  %v805 = vsub.f32 %v789, %v801
  %v806 = vsub.f32 %v790, %v801
  %v807 = vsub.f32 %v791, %v801
  %v808 = vsub.f32 %v792, %v801
  %v809 = vsel %vm473, %v802, 0.0
  %v810 = vsel %vm474, %v803, 0.0
  %v811 = vsel %vm475, %v804, 0.0
  %v812 = vsel %vm476, %v805, 0.0
  %v813 = vsel %vm477, %v806, 0.0
  %v814 = vsel %vm478, %v807, 0.0
  %v815 = vsel %vm479, %v808, 0.0
  %v816 = vmul.f32 %v809, %v809
  %v817 = vmul.f32 %v810, %v810
  %v818 = vmul.f32 %v811, %v811
  %v819 = vmul.f32 %v812, %v812
  %v820 = vmul.f32 %v813, %v813
  %v821 = vmul.f32 %v814, %v814
  %v822 = vmul.f32 %v815, %v815
  %v823 = vadd.f32 %v816, %v817
  %v824 = vadd.f32 %v823, %v818
  %v825 = vadd.f32 %v824, %v819
  %v826 = vadd.f32 %v825, %v820
  %v827 = vadd.f32 %v826, %v821
  %v828 = vadd.f32 %v827, %v822
  %829 = vadd.xlane.f32.xlu0 %v828
  %v830 = vpop.xlane.xlu0 %829
  %v831 = vmul.f32 %v830, 0.0017361111
  %v832 = vadd.f32 %v831, 1e-05
  %v833 = vrsqrt.pop %v832
  %v834 = vmul.f32 %v809, %v833
  %v835 = vmul.f32 %v810, %v833
  %v836 = vmul.f32 %v811, %v833
  %v837 = vmul.f32 %v812, %v833
  %v838 = vmul.f32 %v813, %v833
  %v839 = vmul.f32 %v814, %v833
  %v840 = vmul.f32 %v815, %v833
  %841 = vset.pattern.permute.xlu0 10
  %842 = vperm.xlu0 %841, %v465
  %v843 = vpop.permute.xlu0 %842
  %v845 = vmul.f32 %v843, %v834
  %v846 = vmul.f32 %v843, %v835
  %v847 = vmul.f32 %v843, %v836
  %v848 = vmul.f32 %v843, %v837
  %v849 = vmul.f32 %v843, %v838
  %v850 = vmul.f32 %v843, %v839
  %v851 = vmul.f32 %v843, %v840
  %852 = vset.pattern.permute.xlu0 11
  %853 = vperm.xlu0 %852, %v465
  %v854 = vpop.permute.xlu0 %853
  %v856 = vadd.f32 %v845, %v854
  %v857 = vadd.f32 %v846, %v854
  %v858 = vadd.f32 %v847, %v854
  %v859 = vadd.f32 %v848, %v854
  %v860 = vadd.f32 %v849, %v854
  %v861 = vadd.f32 %v850, %v854
  %v862 = vadd.f32 %v851, %v854
  %v863 = vsel %vm473, %v856, 0.0
  %v864 = vsel %vm474, %v857, 0.0
  %v865 = vsel %vm475, %v858, 0.0
  %v866 = vsel %vm476, %v859, 0.0
  %v867 = vsel %vm477, %v860, 0.0
  %v868 = vsel %vm478, %v861, 0.0
  %v869 = vsel %vm479, %v862, 0.0
  %s870 = scalar_lea.vmem %s1, 16
  %v871 = vld [vmem:[%s870] sm:$0xff]
  %vm872 = vcmp.ge.f32.partialorder %v26, 1.0
  %vm873 = vcmp.ge.f32.partialorder %v30, 1.0
  %vm874 = vcmp.ge.f32.partialorder %v34, 1.0
  %vm875 = vcmp.ge.f32.partialorder %v38, 1.0
  %vm876 = vcmp.ge.f32.partialorder %v42, 1.0
  %vm877 = vcmp.ge.f32.partialorder %v46, 1.0
  %vm878 = vcmp.ge.f32.partialorder %v50, 1.0
  %vm879 = vcmp.ge.f32.partialorder %v26, 0.0
  %vm880 = vcmp.ge.f32.partialorder %v30, 0.0
  %vm881 = vcmp.ge.f32.partialorder %v34, 0.0
  %vm882 = vcmp.ge.f32.partialorder %v38, 0.0
  %vm883 = vcmp.ge.f32.partialorder %v42, 0.0
  %vm884 = vcmp.ge.f32.partialorder %v46, 0.0
  %vm885 = vcmp.ge.f32.partialorder %v50, 0.0
  %887 = vrot.lane.b32.xlu0 %v871, 127
  %v888 = vpop.permute.xlu0 %887
  %v890 = vadd.f32 %v871, %v888
  %892 = vset.pattern.permute.xlu0 8
  %893 = vperm.xlu0 %892, %v890
  %v894 = vpop.permute.xlu0 %893
  %896 = vset.pattern.permute.xlu0 9
  %897 = vperm.xlu0 %896, %v871
  %v898 = vpop.permute.xlu0 %897
  %v900 = vsel %vm872, %v894, %v898
  %v901 = vsel %vm873, %v894, %v898
  %v902 = vsel %vm874, %v894, %v898
  %v903 = vsel %vm875, %v894, %v898
  %v904 = vsel %vm876, %v894, %v898
  %v905 = vsel %vm877, %v894, %v898
  %v906 = vsel %vm878, %v894, %v898
  %v907 = vsel %vm94, %v871, 0
  %909 = vmatprep.subr.mxu0 %v864
  %910 = vmatpush1.msra.mxu0 %v863
  %911 = vmatprep.subr.mxu0 0.0
  %912 = vmatpush1.msra.mxu0 0.0
  %913 = vmatprep.subr.mxu0 0.0
  %914 = vmatpush1.msra.mxu0 0.0
  %915 = vmatprep.subr.mxu0 0.0
  %916 = vmatpush1.msra.mxu0 0.0
  %917 = vmatprep.subr.mxu0 0.0
  %918 = vmatpush1.msra.mxu0 0.0
  %919 = vmatprep.subr.mxu0 0.0
  %920 = vmatpush1.msra.mxu0 0.0
  %921 = vmatprep.subr.mxu0 0.0
  %922 = vmatpush1.msra.mxu0 0.0
  %923 = vmatprep.subr.mxu0 0.0
  %924 = vmatpush1.msra.mxu0 0.0
  %925 = vmatprep.subr.mxu0 0.0
  %926 = vmatpush1.msra.mxu0 0.0
  %927 = vmatprep.subr.mxu0 0.0
  %928 = vmatpush1.msra.mxu0 0.0
  %929 = vmatprep.subr.mxu0 0.0
  %930 = vmatpush1.msra.mxu0 0.0
  %931 = vmatprep.subr.mxu0 0.0
  %932 = vmatpush1.msra.mxu0 0.0
  %933 = vmatprep.subr.mxu0 0.0
  %934 = vmatpush1.msra.mxu0 0.0
  %935 = vmatprep.subr.mxu0 0.0
  %936 = vmatpush1.msra.mxu0 0.0
  %937 = vmatprep.subr.mxu0 0.0
  %938 = vmatpush1.msra.mxu0 0.0
  %939 = vmatprep.subr.mxu0 0.0
  %940 = vmatpush1.msra.mxu0 0.0
  %941 = vmatprep.subr.mxu0 0.0
  %942 = vmatpush1.msra.mxu0 0.0
  %943 = vmatprep.subr.mxu0 0.0
  %944 = vmatpush1.msra.mxu0 0.0
  %945 = vmatprep.subr.mxu0 0.0
  %946 = vmatpush1.msra.mxu0 0.0
  %947 = vmatprep.subr.mxu0 0.0
  %948 = vmatpush1.msra.mxu0 0.0
  %949 = vmatprep.subr.mxu0 0.0
  %950 = vmatpush1.msra.mxu0 0.0
  %951 = vmatprep.subr.mxu0 0.0
  %952 = vmatpush1.msra.mxu0 0.0
  %953 = vmatprep.subr.mxu0 0.0
  %954 = vmatpush1.msra.mxu0 0.0
  %955 = vmatprep.subr.mxu0 0.0
  %956 = vmatpush1.msra.mxu0 0.0
  %957 = vmatprep.subr.mxu0 0.0
  %958 = vmatpush1.msra.mxu0 0.0
  %959 = vmatprep.subr.mxu0 0.0
  %960 = vmatpush1.msra.mxu0 0.0
  %961 = vmatprep.subr.mxu0 0.0
  %962 = vmatpush1.msra.mxu0 0.0
  %963 = vmatprep.subr.mxu0 0.0
  %964 = vmatpush1.msra.mxu0 0.0
  %965 = vmatprep.subr.mxu0 0.0
  %966 = vmatpush1.msra.mxu0 0.0
  %967 = vmatprep.subr.mxu0 0.0
  %968 = vmatpush1.msra.mxu0 0.0
  %969 = vmatprep.subr.mxu0 0.0
  %970 = vmatpush1.msra.mxu0 0.0
  %971 = vmatprep.subr.mxu0 0.0
  %972 = vmatpush1.msra.mxu0 0.0
  %973 = vmatprep.mubr.f32.mxu0 0.0
  %974 = vmatmul.mubr.f32.gmra.mrb[0].mxu0 %v907
  %v975 = vpop.f32.mrb[0].mxu0
  %v976 = vadd.f32 %v900, %v975
  %v977 = vpop.f32.mrb[0].mxu0
  %v978 = vadd.f32 %v901, %v977
  %979 = vdwg.mxu0
  %980 = vmatprep.subr.mxu0 %v866
  %981 = vmatpush1.msra.mxu0 %v865
  %982 = vmatprep.subr.mxu0 0.0
  %983 = vmatpush1.msra.mxu0 0.0
  %984 = vmatprep.subr.mxu0 0.0
  %985 = vmatpush1.msra.mxu0 0.0
  %986 = vmatprep.subr.mxu0 0.0
  %987 = vmatpush1.msra.mxu0 0.0
  %988 = vmatprep.subr.mxu0 0.0
  %989 = vmatpush1.msra.mxu0 0.0
  %990 = vmatprep.subr.mxu0 0.0
  %991 = vmatpush1.msra.mxu0 0.0
  %992 = vmatprep.subr.mxu0 0.0
  %993 = vmatpush1.msra.mxu0 0.0
  %994 = vmatprep.subr.mxu0 0.0
  %995 = vmatpush1.msra.mxu0 0.0
  %996 = vmatprep.subr.mxu0 0.0
  %997 = vmatpush1.msra.mxu0 0.0
  %998 = vmatprep.subr.mxu0 0.0
  %999 = vmatpush1.msra.mxu0 0.0
  %1000 = vmatprep.subr.mxu0 0.0
  %1001 = vmatpush1.msra.mxu0 0.0
  %1002 = vmatprep.subr.mxu0 0.0
  %1003 = vmatpush1.msra.mxu0 0.0
  %1004 = vmatprep.subr.mxu0 0.0
  %1005 = vmatpush1.msra.mxu0 0.0
  %1006 = vmatprep.subr.mxu0 0.0
  %1007 = vmatpush1.msra.mxu0 0.0
  %1008 = vmatprep.subr.mxu0 0.0
  %1009 = vmatpush1.msra.mxu0 0.0
  %1010 = vmatprep.subr.mxu0 0.0
  %1011 = vmatpush1.msra.mxu0 0.0
  %1012 = vmatprep.subr.mxu0 0.0
  %1013 = vmatpush1.msra.mxu0 0.0
  %1014 = vmatprep.subr.mxu0 0.0
  %1015 = vmatpush1.msra.mxu0 0.0
  %1016 = vmatprep.subr.mxu0 0.0
  %1017 = vmatpush1.msra.mxu0 0.0
  %1018 = vmatprep.subr.mxu0 0.0
  %1019 = vmatpush1.msra.mxu0 0.0
  %1020 = vmatprep.subr.mxu0 0.0
  %1021 = vmatpush1.msra.mxu0 0.0
  %1022 = vmatprep.subr.mxu0 0.0
  %1023 = vmatpush1.msra.mxu0 0.0
  %1024 = vmatprep.subr.mxu0 0.0
  %1025 = vmatpush1.msra.mxu0 0.0
  %1026 = vmatprep.subr.mxu0 0.0
  %1027 = vmatpush1.msra.mxu0 0.0
  %1028 = vmatprep.subr.mxu0 0.0
  %1029 = vmatpush1.msra.mxu0 0.0
  %1030 = vmatprep.subr.mxu0 0.0
  %1031 = vmatpush1.msra.mxu0 0.0
  %1032 = vmatprep.subr.mxu0 0.0
  %1033 = vmatpush1.msra.mxu0 0.0
  %1034 = vmatprep.subr.mxu0 0.0
  %1035 = vmatpush1.msra.mxu0 0.0
  %1036 = vmatprep.subr.mxu0 0.0
  %1037 = vmatpush1.msra.mxu0 0.0
  %1038 = vmatprep.subr.mxu0 0.0
  %1039 = vmatpush1.msra.mxu0 0.0
  %1040 = vmatprep.subr.mxu0 0.0
  %1041 = vmatpush1.msra.mxu0 0.0
  %1042 = vmatprep.subr.mxu0 0.0
  %1043 = vmatpush1.msra.mxu0 0.0
  %1044 = vmatprep.mubr.f32.mxu0 0.0
  %1045 = vmatmul.mubr.f32.gmra.mrb[0].mxu0 %v907
  %v1046 = vpop.f32.mrb[0].mxu0
  %v1047 = vadd.f32 %v902, %v1046
  %v1048 = vpop.f32.mrb[0].mxu0
  %v1049 = vadd.f32 %v903, %v1048
  %1050 = vdwg.mxu0
  %1051 = vmatprep.subr.mxu0 %v868
  %1052 = vmatpush1.msra.mxu0 %v867
  %1053 = vmatprep.subr.mxu0 0.0
  %1054 = vmatpush1.msra.mxu0 0.0
  %1055 = vmatprep.subr.mxu0 0.0
  %1056 = vmatpush1.msra.mxu0 0.0
  %1057 = vmatprep.subr.mxu0 0.0
  %1058 = vmatpush1.msra.mxu0 0.0
  %1059 = vmatprep.subr.mxu0 0.0
  %1060 = vmatpush1.msra.mxu0 0.0
  %1061 = vmatprep.subr.mxu0 0.0
  %1062 = vmatpush1.msra.mxu0 0.0
  %1063 = vmatprep.subr.mxu0 0.0
  %1064 = vmatpush1.msra.mxu0 0.0
  %1065 = vmatprep.subr.mxu0 0.0
  %1066 = vmatpush1.msra.mxu0 0.0
  %1067 = vmatprep.subr.mxu0 0.0
  %1068 = vmatpush1.msra.mxu0 0.0
  %1069 = vmatprep.subr.mxu0 0.0
  %1070 = vmatpush1.msra.mxu0 0.0
  %1071 = vmatprep.subr.mxu0 0.0
  %1072 = vmatpush1.msra.mxu0 0.0
  %1073 = vmatprep.subr.mxu0 0.0
  %1074 = vmatpush1.msra.mxu0 0.0
  %1075 = vmatprep.subr.mxu0 0.0
  %1076 = vmatpush1.msra.mxu0 0.0
  %1077 = vmatprep.subr.mxu0 0.0
  %1078 = vmatpush1.msra.mxu0 0.0
  %1079 = vmatprep.subr.mxu0 0.0
  %1080 = vmatpush1.msra.mxu0 0.0
  %1081 = vmatprep.subr.mxu0 0.0
  %1082 = vmatpush1.msra.mxu0 0.0
  %1083 = vmatprep.subr.mxu0 0.0
  %1084 = vmatpush1.msra.mxu0 0.0
  %1085 = vmatprep.subr.mxu0 0.0
  %1086 = vmatpush1.msra.mxu0 0.0
  %1087 = vmatprep.subr.mxu0 0.0
  %1088 = vmatpush1.msra.mxu0 0.0
  %1089 = vmatprep.subr.mxu0 0.0
  %1090 = vmatpush1.msra.mxu0 0.0
  %1091 = vmatprep.subr.mxu0 0.0
  %1092 = vmatpush1.msra.mxu0 0.0
  %1093 = vmatprep.subr.mxu0 0.0
  %1094 = vmatpush1.msra.mxu0 0.0
  %1095 = vmatprep.subr.mxu0 0.0
  %1096 = vmatpush1.msra.mxu0 0.0
  %1097 = vmatprep.subr.mxu0 0.0
  %1098 = vmatpush1.msra.mxu0 0.0
  %1099 = vmatprep.subr.mxu0 0.0
  %1100 = vmatpush1.msra.mxu0 0.0
  %1101 = vmatprep.subr.mxu0 0.0
  %1102 = vmatpush1.msra.mxu0 0.0
  %1103 = vmatprep.subr.mxu0 0.0
  %1104 = vmatpush1.msra.mxu0 0.0
  %1105 = vmatprep.subr.mxu0 0.0
  %1106 = vmatpush1.msra.mxu0 0.0
  %1107 = vmatprep.subr.mxu0 0.0
  %1108 = vmatpush1.msra.mxu0 0.0
  %1109 = vmatprep.subr.mxu0 0.0
  %1110 = vmatpush1.msra.mxu0 0.0
  %1111 = vmatprep.subr.mxu0 0.0
  %1112 = vmatpush1.msra.mxu0 0.0
  %1113 = vmatprep.subr.mxu0 0.0
  %1114 = vmatpush1.msra.mxu0 0.0
  %1115 = vmatprep.mubr.f32.mxu0 0.0
  %1116 = vmatmul.mubr.f32.gmra.mrb[0].mxu0 %v907
  %v1117 = vpop.f32.mrb[0].mxu0
  %v1118 = vadd.f32 %v904, %v1117
  %v1119 = vpop.f32.mrb[0].mxu0
  %v1120 = vadd.f32 %v905, %v1119
  %1121 = vdwg.mxu0
  %1122 = vmatprep.subr.mxu0 0.0
  %1123 = vmatpush1.msra.mxu0 %v869
  %1124 = vmatprep.subr.mxu0 0.0
  %1125 = vmatpush1.msra.mxu0 0.0
  %1126 = vmatprep.subr.mxu0 0.0
  %1127 = vmatpush1.msra.mxu0 0.0
  %1128 = vmatprep.subr.mxu0 0.0
  %1129 = vmatpush1.msra.mxu0 0.0
  %1130 = vmatprep.subr.mxu0 0.0
  %1131 = vmatpush1.msra.mxu0 0.0
  %1132 = vmatprep.subr.mxu0 0.0
  %1133 = vmatpush1.msra.mxu0 0.0
  %1134 = vmatprep.subr.mxu0 0.0
  %1135 = vmatpush1.msra.mxu0 0.0
  %1136 = vmatprep.subr.mxu0 0.0
  %1137 = vmatpush1.msra.mxu0 0.0
  %1138 = vmatprep.subr.mxu0 0.0
  %1139 = vmatpush1.msra.mxu0 0.0
  %1140 = vmatprep.subr.mxu0 0.0
  %1141 = vmatpush1.msra.mxu0 0.0
  %1142 = vmatprep.subr.mxu0 0.0
  %1143 = vmatpush1.msra.mxu0 0.0
  %1144 = vmatprep.subr.mxu0 0.0
  %1145 = vmatpush1.msra.mxu0 0.0
  %1146 = vmatprep.subr.mxu0 0.0
  %1147 = vmatpush1.msra.mxu0 0.0
  %1148 = vmatprep.subr.mxu0 0.0
  %1149 = vmatpush1.msra.mxu0 0.0
  %1150 = vmatprep.subr.mxu0 0.0
  %1151 = vmatpush1.msra.mxu0 0.0
  %1152 = vmatprep.subr.mxu0 0.0
  %1153 = vmatpush1.msra.mxu0 0.0
  %1154 = vmatprep.subr.mxu0 0.0
  %1155 = vmatpush1.msra.mxu0 0.0
  %1156 = vmatprep.subr.mxu0 0.0
  %1157 = vmatpush1.msra.mxu0 0.0
  %1158 = vmatprep.subr.mxu0 0.0
  %1159 = vmatpush1.msra.mxu0 0.0
  %1160 = vmatprep.subr.mxu0 0.0
  %1161 = vmatpush1.msra.mxu0 0.0
  %1162 = vmatprep.subr.mxu0 0.0
  %1163 = vmatpush1.msra.mxu0 0.0
  %1164 = vmatprep.subr.mxu0 0.0
  %1165 = vmatpush1.msra.mxu0 0.0
  %1166 = vmatprep.subr.mxu0 0.0
  %1167 = vmatpush1.msra.mxu0 0.0
  %1168 = vmatprep.subr.mxu0 0.0
  %1169 = vmatpush1.msra.mxu0 0.0
  %1170 = vmatprep.subr.mxu0 0.0
  %1171 = vmatpush1.msra.mxu0 0.0
  %1172 = vmatprep.subr.mxu0 0.0
  %1173 = vmatpush1.msra.mxu0 0.0
  %1174 = vmatprep.subr.mxu0 0.0
  %1175 = vmatpush1.msra.mxu0 0.0
  %1176 = vmatprep.subr.mxu0 0.0
  %1177 = vmatpush1.msra.mxu0 0.0
  %1178 = vmatprep.subr.mxu0 0.0
  %1179 = vmatpush1.msra.mxu0 0.0
  %1180 = vmatprep.subr.mxu0 0.0
  %1181 = vmatpush1.msra.mxu0 0.0
  %1182 = vmatprep.subr.mxu0 0.0
  %1183 = vmatpush1.msra.mxu0 0.0
  %1184 = vmatprep.subr.mxu0 0.0
  %1185 = vmatpush1.msra.mxu0 0.0
  %1186 = vmatprep.mubr.f32.mxu0 0.0
  %1187 = vmatmul.mubr.f32.gmra.mrb[0].mxu0 %v907
  %v1188 = vpop.f32.mrb[0].mxu0
  %v1189 = vadd.f32 %v906, %v1188
  %v1190 = vpop.f32.mrb[0].mxu0
  %1191 = vdwg.mxu0
  %v1192 = vsel %vm879, %v976, 0.0
  %v1193 = vsel %vm880, %v978, 0.0
  %v1194 = vsel %vm881, %v1047, 0.0
  %v1195 = vsel %vm882, %v1049, 0.0
  %v1196 = vsel %vm883, %v1118, 0.0
  %v1197 = vsel %vm884, %v1120, 0.0
  %v1198 = vsel %vm885, %v1189, 0.0
  %v1199 = vadd.f32 %v1192, %v1193
  %v1200 = vadd.f32 %v1199, %v1194
  %v1201 = vadd.f32 %v1200, %v1195
  %v1202 = vadd.f32 %v1201, %v1196
  %v1203 = vadd.f32 %v1202, %v1197
  %v1204 = vadd.f32 %v1203, %v1198
  %1205 = vadd.xlane.f32.xlu0 %v1204
  %v1206 = vpop.xlane.xlu0 %1205
  %v1207 = vmul.f32 %v1206, 0.0012755102
  %v1208 = vsub.f32 %v1192, %v1207
  %v1209 = vsub.f32 %v1193, %v1207
  %v1210 = vsub.f32 %v1194, %v1207
  %v1211 = vsub.f32 %v1195, %v1207
  %v1212 = vsub.f32 %v1196, %v1207
  %v1213 = vsub.f32 %v1197, %v1207
  %v1214 = vsub.f32 %v1198, %v1207
  %v1215 = vsel %vm879, %v1208, 0.0
  %v1216 = vsel %vm880, %v1209, 0.0
  %v1217 = vsel %vm881, %v1210, 0.0
  %v1218 = vsel %vm882, %v1211, 0.0
  %v1219 = vsel %vm883, %v1212, 0.0
  %v1220 = vsel %vm884, %v1213, 0.0
  %v1221 = vsel %vm885, %v1214, 0.0
  %v1222 = vmul.f32 %v1215, %v1215
  %v1223 = vmul.f32 %v1216, %v1216
  %v1224 = vmul.f32 %v1217, %v1217
  %v1225 = vmul.f32 %v1218, %v1218
  %v1226 = vmul.f32 %v1219, %v1219
  %v1227 = vmul.f32 %v1220, %v1220
  %v1228 = vmul.f32 %v1221, %v1221
  %v1229 = vadd.f32 %v1222, %v1223
  %v1230 = vadd.f32 %v1229, %v1224
  %v1231 = vadd.f32 %v1230, %v1225
  %v1232 = vadd.f32 %v1231, %v1226
  %v1233 = vadd.f32 %v1232, %v1227
  %v1234 = vadd.f32 %v1233, %v1228
  %1235 = vadd.xlane.f32.xlu0 %v1234
  %v1236 = vpop.xlane.xlu0 %1235
  %v1237 = vmul.f32 %v1236, 0.0012755102
  %v1238 = vadd.f32 %v1237, 1e-05
  %v1239 = vrsqrt.pop %v1238
  %v1240 = vmul.f32 %v1215, %v1239
  %v1241 = vmul.f32 %v1216, %v1239
  %v1242 = vmul.f32 %v1217, %v1239
  %v1243 = vmul.f32 %v1218, %v1239
  %v1244 = vmul.f32 %v1219, %v1239
  %v1245 = vmul.f32 %v1220, %v1239
  %v1246 = vmul.f32 %v1221, %v1239
  %1247 = vset.pattern.permute.xlu0 10
  %1248 = vperm.xlu0 %1247, %v871
  %v1249 = vpop.permute.xlu0 %1248
  %v1251 = vmul.f32 %v1249, %v1240
  %v1252 = vmul.f32 %v1249, %v1241
  %v1253 = vmul.f32 %v1249, %v1242
  %v1254 = vmul.f32 %v1249, %v1243
  %v1255 = vmul.f32 %v1249, %v1244
  %v1256 = vmul.f32 %v1249, %v1245
  %v1257 = vmul.f32 %v1249, %v1246
  %1258 = vset.pattern.permute.xlu0 11
  %1259 = vperm.xlu0 %1258, %v871
  %v1260 = vpop.permute.xlu0 %1259
  %v1262 = vadd.f32 %v1251, %v1260
  %v1263 = vadd.f32 %v1252, %v1260
  %v1264 = vadd.f32 %v1253, %v1260
  %v1265 = vadd.f32 %v1254, %v1260
  %v1266 = vadd.f32 %v1255, %v1260
  %v1267 = vadd.f32 %v1256, %v1260
  %v1268 = vadd.f32 %v1257, %v1260
  %1269 = vst [vmem:[%s3] sm:$0xff] %v1262
  %1270 = vst [vmem:[%s3 + $0x8] sm:$0xff] %v1263
  %1271 = vst [vmem:[%s3 + $0x10] sm:$0xff] %v1264
  %1272 = vst [vmem:[%s3 + $0x18] sm:$0xff] %v1265
  %1273 = vst [vmem:[%s3 + $0x20] sm:$0xff] %v1266
  %1274 = vst [vmem:[%s3 + $0x28] sm:$0xff] %v1267
  %1275 = vst [vmem:[%s3 + $0x30] sm:$0xff] %v1268
  // Predicated region
  $region14: #{model_forward_pallas.1} parent=0 // pred_check
    _
  $region15: #{model_forward_pallas.1} parent=0 // pred_check_branch
    %1277 = sbr.rel (0) target = $region17
  $region16: #{model_forward_pallas.1} parent=0 // pred_region
    _
  $region17: #{model_forward_pallas.1} parent=0 // pred_fallthru
    _
  // Predicated region
  $region18: #{model_forward_pallas.1} parent=0 // pred_check
    _
  $region19: #{model_forward_pallas.1} parent=0 // pred_check_branch
    %1279 = sbr.rel (0) target = $region21
  $region20: #{model_forward_pallas.1} parent=0 // pred_region
    _
  $region21: #{model_forward_pallas.1} parent=0 // pred_fallthru
    _

</llo_original>
